<compile_context>
chip_gen: v5e
topology: v5e:2x2
jax: 0.10.0
libtpu: 0.0.40
codegen_flags: <defaults>
</compile_context>

<pallas_src>
import jax
import jax.numpy as jnp
from jax.experimental import pallas as pl
from jax.experimental.pallas import tpu as pltpu

F32 = jnp.float32
BF16 = jnp.bfloat16


def _device_kind():
    try:
        return jax.devices()[0].device_kind.lower()
    except Exception:
        return ""


_KIND = _device_kind()
_IS_V7 = "v7" in _KIND
_IS_V5 = "v5" in _KIND

VMEM_LIMIT = (48 if _IS_V7 else 96) * 1024 * 1024   # leave headroom on v7x (64 MiB total)
TM_DEFAULT = 256 if _IS_V7 else 512                 # M tile for the linears / tail
ATTN_TQ = 256                                       # query-axis tile for attention
LSTM_TC = 64                                        # time chunk for the LSTM recurrence
ENERGY_DTYPE = F32 if _IS_V5 else BF16              # v5e has no bf16 VPU/EUP


def _round_up(x, m):
    return ((x + m - 1) // m) * m


# ---------------------------------------------------------------------------
# Kernel 1: M-tiled linear  y = x @ Wt + b   (bf16 operands, f32 accumulation)
# Weights arrive pre-transposed/pre-cast (In, Out) bf16.
# ---------------------------------------------------------------------------
def _linear_kernel(x_ref, w_ref, b_ref, o_ref):
    y = jnp.dot(x_ref[...], w_ref[...], preferred_element_type=F32) + b_ref[...]
    o_ref[...] = y.astype(o_ref.dtype)


def linear(x2d, wt, b2=None, out_dtype=F32):
    M, In = x2d.shape
    Out = wt.shape[1]
    TM = min(TM_DEFAULT, _round_up(max(M, 8), 8))
    Mp = _round_up(M, TM)
    xp = x2d.astype(BF16)
    if Mp != M:
        xp = jnp.pad(xp, ((0, Mp - M), (0, 0)))
    if b2 is None:
        b2 = jnp.zeros((1, Out), F32)
    out = pl.pallas_call(
        _linear_kernel,
        out_shape=jax.ShapeDtypeStruct((Mp, Out), out_dtype),
        grid=(Mp // TM,),
        in_specs=[pl.BlockSpec((TM, In), lambda i: (i, 0)),
                  pl.BlockSpec((In, Out), lambda i: (0, 0)),
                  pl.BlockSpec((1, Out), lambda i: (0, 0))],
        out_specs=pl.BlockSpec((TM, Out), lambda i: (i, 0)),
        compiler_params=pltpu.CompilerParams(
            dimension_semantics=("parallel",),
            vmem_limit_bytes=VMEM_LIMIT),
    )(xp, wt, b2)
    return out[:M] if Mp != M else out


# ---------------------------------------------------------------------------
# Kernel 2: LSTM recurrence, time-chunked.
#   gx   : (T, B, 4H) bf16  precomputed x @ Wih^T + (bih + bhh), gate order i,f,g,o
#   whh_t: (H, 4H)    bf16  fused recurrent weight (already transposed)
#   mask : (T, B, 1)  f32   length mask (pack/pad_packed equivalence)
# h/c persist in VMEM scratch across grid (time-chunk) steps; one fused
# (B,H)x(H,4H) matmul per timestep; per-chunk output written as one bf16 block.
# ---------------------------------------------------------------------------
def _lstm_kernel(tc, H):
    def kernel(gx_ref, whh_ref, mask_ref, o_ref, h_scr, c_scr, o_scr):
        @pl.when(pl.program_id(0) == 0)
        def _():
            h_scr[...] = jnp.zeros_like(h_scr)
            c_scr[...] = jnp.zeros_like(c_scr)

        def body(t, carry):
            hb = h_scr[...].astype(BF16)                                  # (B, H)
            g = gx_ref[t].astype(F32) + jnp.dot(
                hb, whh_ref[...], preferred_element_type=F32)             # (B, 4H)
            i = jax.nn.sigmoid(g[:, :H])
            f = jax.nn.sigmoid(g[:, H:2 * H])
            gg = jnp.tanh(g[:, 2 * H:3 * H])
            o = jax.nn.sigmoid(g[:, 3 * H:])
            c = f * c_scr[...] + i * gg
            h_new = o * jnp.tanh(c)
            c_scr[...] = c
            h_scr[...] = h_new
            o_scr[t] = h_new
            return carry

        jax.lax.fori_loop(0, tc, body, 0)
        # single lane-dense bf16 block store, length-mask folded in
        o_ref[...] = (o_scr[...] * mask_ref[...]).astype(BF16)
    return kernel


def lstm_layer(x, lp, tmask):
    """x: (T, B, In) -> (T, B, H) bf16 (length-masked)."""
    T, B, In = x.shape
    H = lp["whh_t"].shape[0]
    # hoisted input projection: one big MXU matmul over all timesteps, bf16 out
    gx = linear(x.reshape(T * B, In), lp["wih_t"], lp["b"], out_dtype=BF16)
    gx = gx.reshape(T, B, 4 * H)                                          # no transpose
    mask3 = tmask[:, :, None]                                             # (T, B, 1)

    TC = min(LSTM_TC, T)
    Tp = _round_up(T, TC)
    if Tp != T:
        gx = jnp.pad(gx, ((0, Tp - T), (0, 0), (0, 0)))
        mask3 = jnp.pad(mask3, ((0, Tp - T), (0, 0), (0, 0)))

    out = pl.pallas_call(
        _lstm_kernel(TC, H),
        out_shape=jax.ShapeDtypeStruct((Tp, B, H), BF16),
        grid=(Tp // TC,),
        in_specs=[pl.BlockSpec((TC, B, 4 * H), lambda i: (i, 0, 0)),
                  pl.BlockSpec((H, 4 * H), lambda i: (0, 0)),
                  pl.BlockSpec((TC, B, 1), lambda i: (i, 0, 0))],
        out_specs=pl.BlockSpec((TC, B, H), lambda i: (i, 0, 0)),
        scratch_shapes=[pltpu.VMEM((B, H), F32),
                        pltpu.VMEM((B, H), F32),
                        pltpu.VMEM((TC, B, H), F32)],
        compiler_params=pltpu.CompilerParams(
            dimension_semantics=("arbitrary",),
            vmem_limit_bytes=VMEM_LIMIT),
    )(gx, lp["whh_t"], mask3)
    return out[:T] if Tp != T else out


# ---------------------------------------------------------------------------
# Kernel 3: additive attention, tiled over (batch, query-tile).
# Energy in ENERGY_DTYPE (bf16 on v6e/v7x), scores/softmax in f32, probs cast
# to bf16 for the context MXU matmul.
# ---------------------------------------------------------------------------
def _attn_kernel(temperature):
    inv_temp = 1.0 / float(temperature)

    def kernel(q_ref, k_ref, v_ref, vv_ref, m_ref, ctx_ref, attn_ref):
        q = q_ref[0]                                                      # (TQ, A)
        k = k_ref[0]                                                      # (Tt, A)
        vv = vv_ref[...]                                                  # (1, A)
        e = jnp.tanh(q[:, None, :] + k[None, :, :])                       # (TQ, Tt, A)
        scores = jnp.sum((e * vv[None, :, :]).astype(F32), axis=-1) * inv_temp
        m = m_ref[0]                                                      # (1, Tt)
        scores = jnp.where(m > 0.5, -1e30, scores)
        smax = jnp.max(scores, axis=-1, keepdims=True)
        p = jnp.exp(scores - smax)
        denom = jnp.sum(p, axis=-1, keepdims=True)
        attn = p * pl.reciprocal(denom, approx=True)
        attn_ref[0] = attn
        ctx_ref[0] = jnp.dot(attn.astype(BF16), v_ref[0].astype(BF16),
                             preferred_element_type=F32)
    return kernel


def attention(qb, kb, vb, vvec, maskf, temperature=1.0):
    B, Tm, A = qb.shape
    Tt = kb.shape[1]
    TQ = min(ATTN_TQ, _round_up(max(Tm, 8), 8))
    Tp = _round_up(Tm, TQ)
    if Tp != Tm:
        qb = jnp.pad(qb, ((0, 0), (0, Tp - Tm), (0, 0)))
    vv = vvec.astype(qb.dtype)
    ctx, attn = pl.pallas_call(
        _attn_kernel(temperature),
        out_shape=(jax.ShapeDtypeStruct((B, Tp, A), F32),
                   jax.ShapeDtypeStruct((B, Tp, Tt), F32)),
        grid=(B, Tp // TQ),
        in_specs=[pl.BlockSpec((1, TQ, A), lambda b, i: (b, i, 0)),
                  pl.BlockSpec((1, Tt, A), lambda b, i: (b, 0, 0)),
                  pl.BlockSpec((1, Tt, A), lambda b, i: (b, 0, 0)),
                  pl.BlockSpec((1, A), lambda b, i: (0, 0)),
                  pl.BlockSpec((1, 1, Tt), lambda b, i: (b, 0, 0))],
        out_specs=(pl.BlockSpec((1, TQ, A), lambda b, i: (b, i, 0)),
                   pl.BlockSpec((1, TQ, Tt), lambda b, i: (b, i, 0))),
        compiler_params=pltpu.CompilerParams(
            dimension_semantics=("parallel", "parallel"),
            vmem_limit_bytes=VMEM_LIMIT),
    )(qb, kb, vb, vv, maskf)
    if Tp != Tm:
        ctx, attn = ctx[:, :Tm], attn[:, :Tm]
    return ctx, attn


# ---------------------------------------------------------------------------
# Kernel 4: fused tail  tanh(dense1) -> tanh(dense2) -> conv(1x1, fused halves)
#           -> affine  mel_out = exp(log_s) * mel + b.  Intermediates in VMEM.
# ---------------------------------------------------------------------------
def _tail_kernel(n_mel):
    def kernel(x_ref, w1_ref, b1_ref, w2_ref, b2_ref, wc_ref, bc_ref, mel_ref,
               melout_ref, logs_ref):
        d1 = jnp.tanh(jnp.dot(x_ref[...], w1_ref[...],
                              preferred_element_type=F32) + b1_ref[...])
        d2 = jnp.tanh(jnp.dot(d1.astype(BF16), w2_ref[...],
                              preferred_element_type=F32) + b2_ref[...])
        y = jnp.dot(d2.astype(BF16), wc_ref[...],
                    preferred_element_type=F32) + bc_ref[...]             # (TM, 2*n_mel)
        log_s = y[:, :n_mel]
        bias = y[:, n_mel:]
        melout_ref[...] = jnp.exp(log_s) * mel_ref[...] + bias
        logs_ref[...] = log_s
    return kernel


def dense_conv_affine(x2d, mel2d, tail, n_mel):
    M, H = x2d.shape
    TM = min(TM_DEFAULT, _round_up(max(M, 8), 8))
    Mp = _round_up(M, TM)
    xp = x2d.astype(BF16)
    melp = mel2d.astype(F32)
    if Mp != M:
        xp = jnp.pad(xp, ((0, Mp - M), (0, 0)))
        melp = jnp.pad(melp, ((0, Mp - M), (0, 0)))
    mel_out, log_s = pl.pallas_call(
        _tail_kernel(n_mel),
        out_shape=(jax.ShapeDtypeStruct((Mp, n_mel), F32),
                   jax.ShapeDtypeStruct((Mp, n_mel), F32)),
        grid=(Mp // TM,),
        in_specs=[pl.BlockSpec((TM, H), lambda i: (i, 0)),
                  pl.BlockSpec((H, H), lambda i: (0, 0)),
                  pl.BlockSpec((1, H), lambda i: (0, 0)),
                  pl.BlockSpec((H, H), lambda i: (0, 0)),
                  pl.BlockSpec((1, H), lambda i: (0, 0)),
                  pl.BlockSpec((H, 2 * n_mel), lambda i: (0, 0)),
                  pl.BlockSpec((1, 2 * n_mel), lambda i: (0, 0)),
                  pl.BlockSpec((TM, n_mel), lambda i: (i, 0))],
        out_specs=(pl.BlockSpec((TM, n_mel), lambda i: (i, 0)),
                   pl.BlockSpec((TM, n_mel), lambda i: (i, 0))),
        compiler_params=pltpu.CompilerParams(
            dimension_semantics=("parallel",),
            vmem_limit_bytes=VMEM_LIMIT),
    )(xp, tail["w1_t"], tail["b1"], tail["w2_t"], tail["b2"],
      tail["wc_t"], tail["bc"], melp)
    return mel_out[:M], log_s[:M]


# ---------------------------------------------------------------------------
# Parameters: raw PyTorch-layout init, then a one-time prep pass that
# transposes / casts / fuses everything into kernel layout.
# ---------------------------------------------------------------------------
def init_params(key, n_mel, n_spk, n_text, n_hidden, n_attn, n_lstm_layers):
    C = n_text + n_spk
    keys = iter(jax.random.split(key, 64))

    def u(shape, scale=0.1):
        return jax.random.uniform(next(keys), shape, F32, -scale, scale)

    params = {}
    params["att_lstm"] = dict(wih=u((4 * n_hidden, n_mel)), whh=u((4 * n_hidden, n_hidden)),
                              bih=u((4 * n_hidden,)), bhh=u((4 * n_hidden,)))
    lstm_layers, in_sz = [], n_hidden + n_attn
    for _ in range(n_lstm_layers):
        lstm_layers.append(dict(wih=u((4 * n_hidden, in_sz)), whh=u((4 * n_hidden, n_hidden)),
                                bih=u((4 * n_hidden,)), bhh=u((4 * n_hidden,))))
        in_sz = n_hidden
    params["lstm"] = lstm_layers
    params["attn"] = dict(wq=u((n_attn, n_hidden)), wk=u((n_attn, C)),
                          wv=u((n_attn, C)), wvv=u((1, n_attn)))
    params["dense"] = [dict(w=u((n_hidden, n_hidden)), b=u((n_hidden,))),
                       dict(w=u((n_hidden, n_hidden)), b=u((n_hidden,)))]
    params["gate"] = dict(w=u((1, n_hidden + n_attn)), b=u((1,)))
    # conv weights/bias zeroed exactly as in the PyTorch __init__
    params["conv"] = dict(w=jnp.zeros((2 * n_mel, n_hidden), F32),
                          b=jnp.zeros((2 * n_mel,), F32))
    return params


def prepare_params(params, n_mel):
    """One-time conversion of weights to kernel layout (done outside forward)."""
    def prep_lstm(lp):
        return dict(
            wih_t=jnp.asarray(lp["wih"], BF16).T,                          # (In, 4H)
            b=jnp.asarray(lp["bih"] + lp["bhh"], F32).reshape(1, -1),      # (1, 4H)
            whh_t=jnp.asarray(lp["whh"], BF16).T)                          # (H, 4H)

    a = params["attn"]
    d1, d2, cv = params["dense"][0], params["dense"][1], params["conv"]
    return dict(
        att_lstm=prep_lstm(params["att_lstm"]),
        lstm=[prep_lstm(lp) for lp in params["lstm"]],
        attn=dict(
            wq_t=jnp.asarray(a["wq"], BF16).T,                             # (H, A)
            wkv_t=jnp.concatenate([jnp.asarray(a["wk"], F32),
                                   jnp.asarray(a["wv"], F32)], 0).T.astype(BF16),  # (C, 2A)
            vvec=jnp.asarray(a["wvv"], F32).reshape(1, -1)),               # (1, A)
        gate=dict(w_t=jnp.asarray(params["gate"]["w"], F32).T,             # (H+A, 1)
                  b=jnp.asarray(params["gate"]["b"], F32)),
        tail=dict(
            w1_t=jnp.asarray(d1["w"], BF16).T, b1=jnp.asarray(d1["b"], F32).reshape(1, -1),
            w2_t=jnp.asarray(d2["w"], BF16).T, b2=jnp.asarray(d2["b"], F32).reshape(1, -1),
            wc_t=jnp.asarray(cv["w"], BF16).T,                             # (H, 2*n_mel)
            bc=jnp.asarray(cv["b"], F32).reshape(1, -1)))


# ---------------------------------------------------------------------------
# AR_Step.forward
# ---------------------------------------------------------------------------
def ar_step_forward(prep, mel, text, mask_bool, out_lens):
    T, B, n_mel = mel.shape
    Tt = text.shape[0]
    H = prep["att_lstm"]["whh_t"].shape[0]
    A = prep["attn"]["wq_t"].shape[1]

    # mel0 = cat([zeros, mel[:-1]], 0)
    mel0 = jnp.concatenate([jnp.zeros((1, B, n_mel), F32), mel[:-1]], axis=0)
    # pack/pad_packed semantics == zeroing outputs beyond out_lens (folded in-kernel)
    tmask = (jnp.arange(T)[:, None] < out_lens[None, :]).astype(F32)       # (T, B)

    att_h = lstm_layer(mel0, prep["att_lstm"], tmask)                      # (T, B, H) bf16

    # additive attention: query projection + fused key/value projection
    pa = prep["attn"]
    q = linear(att_h.reshape(T * B, H), pa["wq_t"],
               out_dtype=ENERGY_DTYPE).reshape(T, B, A)
    kv = linear(text.reshape(Tt * B, -1), pa["wkv_t"],
                out_dtype=ENERGY_DTYPE).reshape(Tt, B, 2 * A)
    qb = jnp.transpose(q, (1, 0, 2))                                       # (B, T, A)
    kvb = jnp.transpose(kv, (1, 0, 2))                                     # (B, Tt, 2A)
    kb, vb = kvb[..., :A], kvb[..., A:]
    maskf = jnp.transpose(mask_bool.astype(F32), (0, 2, 1))                # (B, 1, Tt)
    ctx_b, attn_w = attention(qb, kb, vb, pa["vvec"], maskf)               # (B,T,A),(B,T,Tt)
    attn_ctx = jnp.transpose(ctx_b, (1, 0, 2))                             # (T, B, A)

    decoder_input = jnp.concatenate([att_h, attn_ctx.astype(BF16)], axis=-1)  # (T,B,H+A) bf16

    # gate projection (Out=1): plain XLA — a Pallas call here would be pure
    # launch overhead with a lane-sparse output.
    g = prep["gate"]
    gates = jnp.matmul(decoder_input.astype(F32), g["w_t"]) + g["b"]       # (T, B, 1)

    h = decoder_input
    for lp in prep["lstm"]:
        h = lstm_layer(h, lp, tmask)                                       # masked in-kernel
    lstm_hidden = h                                                        # (T, B, H) bf16

    # fused dense -> dense -> conv(1x1) -> affine coupling
    mel_out2d, log_s2d = dense_conv_affine(
        lstm_hidden.reshape(T * B, H), mel.reshape(T * B, n_mel),
        prep["tail"], n_mel)
    mel_out = mel_out2d.reshape(T, B, n_mel)
    log_s = log_s2d.reshape(T, B, n_mel)
    return mel_out, log_s, gates, attn_w


# ---------------------------------------------------------------------------
# AR_Back_Step.forward
# ---------------------------------------------------------------------------
def _roll_batch(x, shifts):
    """Roll each batch column of (T, B, C) along time by shifts[b] (vmapped)."""
    return jax.vmap(lambda col, s: jnp.roll(col, s, axis=0),
                    in_axes=(1, 0), out_axes=1)(x, shifts)


def ar_back_step_forward(prep, mel, text, mask_bool, out_lens):
    out_lens = jnp.asarray(out_lens, jnp.int32)
    shifts = out_lens.at[0].set(0)          # reference never rolls batch element 0
    mel = _roll_batch(jnp.flip(mel, 0), shifts)
    mel, log_s, gates, attn = ar_step_forward(prep, mel, text, mask_bool, out_lens)
    mel = _roll_batch(mel, -shifts)
    return jnp.flip(mel, 0), log_s, gates, attn


if __name__ == "__main__":
    # module hyper-params (small, consistent with the flowtron constructor)
    n_mel, n_spk, n_text, n_hidden, n_attn, n_lstm_layers = 8, 16, 32, 32, 16, 2
    T, B, Tt = 8, 2, 6

    key = jax.random.PRNGKey(0)
    kp, km, kt = jax.random.split(key, 3)
    raw_params = init_params(kp, n_mel, n_spk, n_text, n_hidden, n_attn, n_lstm_layers)
    prep = prepare_params(raw_params, n_mel)

    mel = jax.random.normal(km, (T, B, n_mel), F32)                   # (T_mel, B, n_mel)
    text = jax.random.normal(kt, (Tt, B, n_text + n_spk), F32)        # (T_text, B, text+spk)
    in_lens = jnp.array([Tt, 4], jnp.int32)
    mask_bool = (jnp.arange(Tt)[None, :, None] >= in_lens[:, None, None])  # (B, Tt, 1), True = pad
    out_lens = jnp.array([T, 6], jnp.int32)                           # mel lengths per batch

    mel_out, log_s, gates, attn = ar_back_step_forward(prep, mel, text, mask_bool, out_lens)
    jax.block_until_ready((mel_out, log_s, gates, attn))

    assert mel_out.shape == (T, B, n_mel)
    assert log_s.shape == (T, B, n_mel)
    assert gates.shape == (T, B, 1)
    assert attn.shape == (B, T, Tt)
    assert bool(jnp.all(jnp.isfinite(mel_out))) and bool(jnp.all(jnp.isfinite(attn)))
    print("KERNEL_OK")
</pallas_src>

<mosaic_0001>
module attributes {stable_mosaic.version = 11 : i64} {
  func.func @_linear_kernel(%arg0: i32, %arg1: memref<16x8xbf16, #tpu.memory_space<vmem>>, %arg2: memref<8x128xbf16, #tpu.memory_space<vmem>>, %arg3: memref<1x128xf32, #tpu.memory_space<vmem>>, %arg4: memref<16x128xbf16, #tpu.memory_space<vmem>>) attributes {dimension_semantics = [#tpu.dimension_semantics<parallel>], iteration_bounds = array<i64: 1>, scalar_prefetch = 0 : i64, scratch_operands = 0 : i64, tpu.core_type = #tpu.core_type<tc>, window_params = [{transform_indices = @transform_0, window_bounds = array<i64: 16, 8>}, {pipeline_mode = #tpu.pipeline_mode<synchronous>, transform_indices = @transform_1, window_bounds = array<i64: 8, 128>}, {pipeline_mode = #tpu.pipeline_mode<synchronous>, transform_indices = @transform_2, window_bounds = array<i64: 1, 128>}, {transform_indices = @transform_3, window_bounds = array<i64: 16, 128>}]} {
    %c0 = arith.constant 0 : index
    %c0_0 = arith.constant 0 : index
    %0 = vector.load %arg1[%c0, %c0_0] : memref<16x8xbf16, #tpu.memory_space<vmem>>, vector<16x8xbf16>
    %c0_1 = arith.constant 0 : index
    %c0_2 = arith.constant 0 : index
    %1 = vector.load %arg2[%c0_1, %c0_2] : memref<8x128xbf16, #tpu.memory_space<vmem>>, vector<8x128xbf16>
    %cst = arith.constant dense<0.000000e+00> : vector<16x128xf32>
    %2 = tpu.matmul %0, %1, %cst {dimension_numbers = #tpu.dot_dimension_numbers<[1], [0], [0], [1], [0, 0, 1, 1], [], []>} : vector<16x8xbf16>, vector<8x128xbf16>, vector<16x128xf32> -> vector<16x128xf32>
    %c0_3 = arith.constant 0 : index
    %c0_4 = arith.constant 0 : index
    %3 = vector.load %arg3[%c0_3, %c0_4] : memref<1x128xf32, #tpu.memory_space<vmem>>, vector<1x128xf32>
    %4 = vector.broadcast %3 : vector<1x128xf32> to vector<16x128xf32>
    %5 = arith.addf %2, %4 : vector<16x128xf32>
    %6 = arith.truncf %5 : vector<16x128xf32> to vector<16x128xbf16>
    %c0_5 = arith.constant 0 : index
    %c0_6 = arith.constant 0 : index
    %7 = vector.load %arg4[%c0_5, %c0_6] : memref<16x128xbf16, #tpu.memory_space<vmem>>, vector<16x128xbf16>
    tpu.vector_store %arg4[%c0_5, %c0_6], %6 {strides = array<i32>} : memref<16x128xbf16, #tpu.memory_space<vmem>>, vector<16x128xbf16>,
    return
  }
  func.func @transform_0(%arg0: i32) -> (i32, i32) {
    %c0_i32 = arith.constant 0 : i32
    %c0_i32_0 = arith.constant 0 : i32
    return %arg0, %c0_i32 : i32, i32
  }
  func.func @transform_1(%arg0: i32) -> (i32, i32) {
    %c0_i32 = arith.constant 0 : i32
    %c0_i32_0 = arith.constant 0 : i32
    %c0_i32_1 = arith.constant 0 : i32
    return %c0_i32, %c0_i32_0 : i32, i32
  }
  func.func @transform_2(%arg0: i32) -> (i32, i32) {
    %c0_i32 = arith.constant 0 : i32
    %c0_i32_0 = arith.constant 0 : i32
    %c0_i32_1 = arith.constant 0 : i32
    return %c0_i32, %c0_i32_0 : i32, i32
  }
  func.func @transform_3(%arg0: i32) -> (i32, i32) {
    %c0_i32 = arith.constant 0 : i32
    %c0_i32_0 = arith.constant 0 : i32
    return %arg0, %c0_i32 : i32, i32
  }
}

</mosaic_0001>

<llo_original>
// kernel: tpu_custom_call.1
$region0: #{tpu_custom_call.1}
  #allocation0 [shape = 'u32[]', space=smem, size = 0x4, offset = 0x4, fixed_abs, tag = 'smem constant byte address 0x4 - core index']
  #allocation1 [shape = 'u32[72,128]{1,0:T(1,128)}', space=vmem, size = 0x9000, scoped, tag = 'internal scratch']
  %s0 = inlined_call_operand.vmem [shape: bf16[16,8], index: 0, kind: input, shape index: {}]
  %s1 = inlined_call_operand.vmem [shape: bf16[8,128], index: 1, kind: input, shape index: {}]
  %s2 = inlined_call_operand.vmem [shape: f32[1,128], index: 2, kind: input, shape index: {}]
  %s3 = inlined_call_operand.hbm [shape: bf16[16,128], index: 3, kind: output, shape index: {}]
  %s4 = sld [smem:[#allocation0]]
  $region22: #{tpu_custom_call.1} parent=0
    _
  %s6 = ssub.s32 1, %s4
  %s7 = scalar_select 0, %s6, %s4
  $region1: #{tpu_custom_call.1} parent=0
    #allocation2 [shape = 'u8[4096]{0}', space=vmem, size = 0x1000, scoped, tag = 'output window, operand 0, single buffered']
    #allocation3 [shape = 's32[1]{0}', space=sflag, size = 0x4, scoped, tag = 'scoped memory for tpu_custom_call.1']
    %8 = vsyncpa [#allocation3], 0
    // Predicated region
    $region2: #{tpu_custom_call.1} parent=1 // pred_check
      _
    $region3: #{tpu_custom_call.1} parent=1 // pred_check_branch
      %10 = sbr.rel (0) target = $region5
    $region4: #{tpu_custom_call.1} parent=1 // pred_region
      _
    $region5: #{tpu_custom_call.1} parent=1 // pred_fallthru
      _
    // Predicated region
    $region6: #{tpu_custom_call.1} parent=1 // pred_check
      _
    $region7: #{tpu_custom_call.1} parent=1 // pred_check_branch
      %12 = sbr.rel (0) target = $region9
    $region8: #{tpu_custom_call.1} parent=1 // pred_region
      _
    $region9: #{tpu_custom_call.1} parent=1 // pred_fallthru
      _
    // Predicated region
    $region10: #{tpu_custom_call.1} parent=1 // pred_check
      _
    $region11: #{tpu_custom_call.1} parent=1 // pred_check_branch
      %14 = sbr.rel (0) target = $region13
    $region12: #{tpu_custom_call.1} parent=1 // pred_region
      _
    $region13: #{tpu_custom_call.1} parent=1 // pred_fallthru
      _
    %v16 = vld [vmem:[%s0] sm:$0xf]
    %v17 = vld [vmem:[%s0 + $0x4] sm:$0xf]
    %v18 = vld [vmem:[%s1] sm:$0xf]
    %v19 = vld [vmem:[%s2] sm:$0x1]
    %v21 = vperm.slane %v19, 0
    %v25 = vunpack.c.l.b16 %v16
    %v26 = vunpack.c.l.b16 %v17
    %v27 = vpack.c.b16 %v26, %v25
    %vm28 = vcmask 64512
    %v30 = vsel %vm28, %v27, 0
    %vm32 = vcmask 1043456
    %v34 = vsel %vm32, %v18, 0
    %36 = vmatpush.bf16.msra.mxu0 0
    %37 = vmatpush.bf16.msra.mxu0 0
    %38 = vmatpush.bf16.msra.mxu0 0
    %39 = vmatpush.bf16.msra.mxu0 0
    %40 = vmatpush.bf16.msra.mxu0 0
    %41 = vmatpush.bf16.msra.mxu0 0
    %42 = vmatpush.bf16.msra.mxu0 0
    %43 = vmatpush.bf16.msra.mxu0 %v34
    %44 = vmatmul.bf16.gmra.mxu0 %v30
    %v45 = vpop.f32.mrf.mxu0
    %v46 = vadd.f32 %v21, %v45
    %v47 = vpop.f32.mrf.mxu0
    %v48 = vadd.f32 %v21, %v47
    %49 = vdwg.mxu0
    %v50 = vpack.c.bf16 %v46, %v46
    %v51 = vpack.c.bf16 %v48, %v48
    %52 = vst [vmem:[#allocation2] sm:$0xf] %v50
    %53 = vst [vmem:[#allocation2 + $0x4] sm:$0xf] %v51
    // Predicated region
    $region14: #{tpu_custom_call.1} parent=1 // pred_check
      _
    $region15: #{tpu_custom_call.1} parent=1 // pred_check_branch
      %55 = sbr.rel (0) target = $region17
    $region16: #{tpu_custom_call.1} parent=1 // pred_region
      %57 = vsyncadd [#allocation3], 0
      %s58 = sshll.u32 [#allocation2], 4
      %s59 = int_to_ptr.vmem [resolvable:$true] %s58
      %s60 = sshll.u32 %s3, 4
      %s61 = int_to_ptr.hbm [resolvable:$true] %s60
      %66 = dma.vmem_to_hbm [thread:$0]  %s59, 128, %s61, [#allocation3], 64, 64, 4
    $region17: #{tpu_custom_call.1} parent=1 // pred_fallthru
      _
    // Predicated region
    $region18: #{tpu_custom_call.1} parent=1 // pred_check
      _
    $region19: #{tpu_custom_call.1} parent=1 // pred_check_branch
      %68 = sbr.rel (0) target = $region21
    $region20: #{tpu_custom_call.1} parent=1 // pred_region
      %70 = dma.done [#allocation3], 128
    $region21: #{tpu_custom_call.1} parent=1 // pred_fallthru
      _
    %71 = vsyncpa [#allocation3], 1

</llo_original>
